<compile_context>
chip_gen: v7x
topology: tpu7x:2x2x1
jax: 0.10.0
libtpu: 0.0.40
codegen_flags: <defaults>
</compile_context>

<pallas_src>
import jax
import jax.numpy as jnp
from jax import lax
from jax.experimental import pallas as pl
from jax.experimental.pallas import tpu as pltpu

LANE = 128          # TPU lane width
MAX_LANE_TILE = 512 # per-grid-step batch tile (lane) width; >512 risks vreg spills


def critic_kernel(ts_ref, a_ref, whh_ref, w2h_ref, packed_ref, out_ref):
    # ts_ref: (T, B)   a_ref: (1, B)            [B = lane tile, multiple of 128]
    # whh_ref: (H, H)  w2h_ref: (H, H)
    # packed_ref: (6H, 1) column stack = [w_ih; b_rnn; v; c; w3c; b3(padded)]
    #   w_ih  : rnn.weight_ih_l0            (H,1)
    #   b_rnn : b_ih + b_hh fused           (H,1)
    #   v     : W2a @ fc1.weight            (H,1)   (fc1/W2a folded out)
    #   c     : W2a @ fc1.bias + fc2.bias   (H,1)
    #   w3c   : fc3.weight, column-major    (H,1)
    #   b3    : fc3.bias in row 0 of an (H,1) zero block
    T, B = ts_ref.shape
    H = whh_ref.shape[0]

    # ---- single constant DMA, unpacked by static 8-aligned sublane slices ----
    wih = packed_ref[pl.ds(0 * H, H), :]            # (H, 1)
    brnn = packed_ref[pl.ds(1 * H, H), :]           # (H, 1)
    v = packed_ref[pl.ds(2 * H, H), :]              # (H, 1)
    c = packed_ref[pl.ds(3 * H, H), :]              # (H, 1)
    w3c = packed_ref[pl.ds(4 * H, H), :]            # (H, 1)
    b3 = packed_ref[pl.ds(5 * H, H), :][0:1, :]     # (1, 1)

    whh = whh_ref[...]                              # hoisted, loop-invariant

    # ---- RNN recurrence (tanh), hidden kept feature-major (H, B) ----
    # Peeled first step: h0 == 0, so whh @ h0 contributes nothing.
    h1 = jnp.tanh(wih * ts_ref[pl.ds(0, 1), :] + brnn)            # (H, B)

    def step(t, h):
        x_row = ts_ref[pl.ds(t, 1), :]                            # (1, B)
        ih = wih * x_row + brnn                                   # independent of h
        hh = jnp.dot(whh, h, preferred_element_type=jnp.float32)  # (H,H)@(H,B)
        return jnp.tanh(hh + ih)

    # T is small & static -> fully unroll so MXU pop of step t overlaps VPU/EUP
    # of step t-1 and the precomputable ih terms slide off the serial chain.
    h_last = lax.fori_loop(1, T, step, h1, unroll=True)           # (H, B)

    # ---- fc2 tail with fc1 / W2a folded into (v, c): one MXU pass ----
    z = (jnp.dot(w2h_ref[...], h_last, preferred_element_type=jnp.float32)
         + v * a_ref[...] + c)                                    # (H, B)
    z = jnp.maximum(z, 0.0)                                       # relu

    # ---- fc3 as VPU mul + XLU sublane reduce (no degenerate 1xHxB matmul) ----
    y = jnp.sum(w3c * z, axis=0, keepdims=True) + b3              # (1, B)

    # ---- logsigmoid (numerically stable) ----
    out_ref[...] = jnp.minimum(y, 0.0) - jnp.log1p(jnp.exp(-jnp.abs(y)))


def _critic_net_forward(kp, ts, a):
    """kp: prepared kernel params. ts: (B, T) f32, a: (B, 1) f32. Returns (B, 1)."""
    B, T = ts.shape
    H = kp["w_hh"].shape[0]

    # Lane-dense batch: pad to a multiple of 128 (min 128).  For B_pad >= 256,
    # size the tile so the grid has >= 2 steps (v7x megacore); cap at 512 lanes
    # to stay under the 64-vreg budget (h / ih / hh temp are 16 vregs each).
    B_pad = max(LANE, -(-B // LANE) * LANE)
    if B_pad <= LANE:
        lane_tile = LANE
    else:
        lane_tile = min(MAX_LANE_TILE, max(LANE, (B_pad // 2) // LANE * LANE))
    B_pad = -(-B_pad // lane_tile) * lane_tile
    grid = (B_pad // lane_tile,)

    # Zero-filled padded lanes -> tanh/exp stay finite on garbage-free lanes.
    ts_tb = jnp.zeros((T, B_pad), jnp.float32).at[:, :B].set(jnp.transpose(ts))
    a_fb = jnp.zeros((1, B_pad), jnp.float32).at[:, :B].set(jnp.transpose(a))

    const = lambda shape: pl.BlockSpec(shape, lambda i: (0, 0))

    cost = pl.CostEstimate(
        flops=2 * H * H * B_pad * T,                   # (T-1) recurrence + fc2 matmuls
        transcendentals=T * H * B_pad + 2 * B_pad,     # tanh per step + exp/log1p tail
        bytes_accessed=4 * (T * B_pad + 2 * B_pad + 2 * H * H + 6 * H),
    )

    out = pl.pallas_call(
        critic_kernel,
        out_shape=jax.ShapeDtypeStruct((1, B_pad), jnp.float32),
        grid=grid,
        in_specs=[
            pl.BlockSpec((T, lane_tile), lambda i: (0, i)),   # ts (time-major)
            pl.BlockSpec((1, lane_tile), lambda i: (0, i)),   # a
            const((H, H)),                                    # rnn w_hh
            const((H, H)),                                    # fc2 weight (hidden half)
            const((6 * H, 1)),                                # packed column constants
        ],
        out_specs=pl.BlockSpec((1, lane_tile), lambda i: (0, i)),
        compiler_params=pltpu.CompilerParams(
            dimension_semantics=("parallel",)),
        cost_estimate=cost,
    )(ts_tb, a_fb, kp["w_hh"], kp["w2h"], kp["packed"])

    return jnp.transpose(out[:, :B])   # (B, 1)


# jit the whole wrapper so transposes / padding fuse with the pallas_call.
critic_net_forward = jax.jit(_critic_net_forward)


def init_params(key, H):
    """Raw params mirroring the PyTorch module's shapes / init."""
    ks = jax.random.split(key, 10)
    bound = 1.0 / float(H) ** 0.5
    u = lambda k, s: jax.random.uniform(k, s, jnp.float32, -bound, bound)
    n = lambda k, s: 0.1 * jax.random.normal(k, s, jnp.float32)  # .normal_(0, 0.1)
    return dict(
        w_ih=u(ks[0], (H, 1)),        # rnn.weight_ih_l0
        w_hh=u(ks[1], (H, H)),        # rnn.weight_hh_l0
        b_ih=u(ks[2], (H,)),          # rnn.bias_ih_l0
        b_hh=u(ks[3], (H,)),          # rnn.bias_hh_l0
        w1=n(ks[4], (H, 1)), b1=u(ks[5], (H,)),        # fc1
        w2=n(ks[6], (H, 2 * H)), b2=u(ks[7], (H,)),    # fc2
        w3=n(ks[8], (1, H)), b3=u(ks[9], (1,)))        # fc3


def prepare_kernel_params(p):
    """Fold fc1 + W2a into (v, c) and pack all (H,1) column constants into one array."""
    H = p["w_hh"].shape[0]
    w2a, w2h = p["w2"][:, :H], p["w2"][:, H:]
    v = w2a @ p["w1"]                                        # (H, 1)
    c = w2a @ p["b1"][:, None] + p["b2"][:, None]            # (H, 1)
    b_rnn = (p["b_ih"] + p["b_hh"])[:, None]                 # (H, 1)
    b3_pad = jnp.zeros((H, 1), jnp.float32).at[0, 0].set(p["b3"][0])
    packed = jnp.concatenate(
        [p["w_ih"], b_rnn, v, c, jnp.transpose(p["w3"]), b3_pad], axis=0)  # (6H, 1)
    return dict(w_hh=p["w_hh"], w2h=w2h, packed=packed)


def reference_forward(p, ts, a):
    """Plain-JAX reference matching the PyTorch forward (batch-major, raw params)."""
    B, T = ts.shape
    H = p["w_hh"].shape[0]
    h = jnp.zeros((B, H), jnp.float32)
    w_ih = p["w_ih"][:, 0]
    b_rnn = p["b_ih"] + p["b_hh"]
    for t in range(T):
        h = jnp.tanh(ts[:, t:t + 1] * w_ih[None, :] + h @ p["w_hh"].T + b_rnn[None, :])
    a_out = a @ p["w1"].T + p["b1"][None, :]
    concat = jnp.concatenate([a_out, h], axis=-1)
    z = jnp.maximum(concat @ p["w2"].T + p["b2"][None, :], 0.0)
    y = z @ p["w3"].T + p["b3"][None, :]
    return jnp.minimum(y, 0.0) - jnp.log1p(jnp.exp(-jnp.abs(y)))


if __name__ == "__main__":
    B, T, H = 4, 8, 32
    key = jax.random.PRNGKey(0)
    kp_key, kts, ka, kts2, ka2 = jax.random.split(key, 5)

    raw = init_params(kp_key, H)
    kparams = jax.tree.map(jax.block_until_ready, prepare_kernel_params(raw))

    # Small-shape check (single 128-lane tile, grid=(1,)).
    ts = jax.random.normal(kts, (B, T), jnp.float32)
    a = jax.random.normal(ka, (B, 1), jnp.float32)
    out = jax.block_until_ready(critic_net_forward(kparams, ts, a))
    ref = reference_forward(raw, ts, a)
    assert out.shape == (B, 1), out.shape
    assert bool(jnp.all(jnp.isfinite(out)))
    assert bool(jnp.allclose(out, ref, rtol=1e-3, atol=1e-3)), (out, ref)

    # Larger-batch check exercising the multi-tile "parallel" grid path (grid=(2,)).
    B2 = 700
    ts2 = jax.random.normal(kts2, (B2, T), jnp.float32)
    a2 = jax.random.normal(ka2, (B2, 1), jnp.float32)
    out2 = jax.block_until_ready(critic_net_forward(kparams, ts2, a2))
    ref2 = reference_forward(raw, ts2, a2)
    assert out2.shape == (B2, 1), out2.shape
    assert bool(jnp.all(jnp.isfinite(out2)))
    assert bool(jnp.allclose(out2, ref2, rtol=1e-3, atol=1e-3))

    print("KERNEL_OK")
</pallas_src>

<mosaic_0001>
module attributes {stable_mosaic.version = 11 : i64} {
  func.func @critic_kernel(%arg0: i32, %arg1: memref<8x128xf32, #tpu.memory_space<vmem>>, %arg2: memref<1x128xf32, #tpu.memory_space<vmem>>, %arg3: memref<32x32xf32, #tpu.memory_space<vmem>>, %arg4: memref<32x32xf32, #tpu.memory_space<vmem>>, %arg5: memref<192x1xf32, #tpu.memory_space<vmem>>, %arg6: memref<1x128xf32, #tpu.memory_space<vmem>>) attributes {dimension_semantics = [#tpu.dimension_semantics<parallel>], iteration_bounds = array<i64: 1>, scalar_prefetch = 0 : i64, scratch_operands = 0 : i64, tpu.core_type = #tpu.core_type<tc>, window_params = [{transform_indices = @transform_0, window_bounds = array<i64: 8, 128>}, {transform_indices = @transform_1, window_bounds = array<i64: 1, 128>}, {pipeline_mode = #tpu.pipeline_mode<synchronous>, transform_indices = @transform_2, window_bounds = array<i64: 32, 32>}, {pipeline_mode = #tpu.pipeline_mode<synchronous>, transform_indices = @transform_3, window_bounds = array<i64: 32, 32>}, {pipeline_mode = #tpu.pipeline_mode<synchronous>, transform_indices = @transform_4, window_bounds = array<i64: 192, 1>}, {transform_indices = @transform_5, window_bounds = array<i64: 1, 128>}]} {
    %c0 = arith.constant 0 : index
    %c0_0 = arith.constant 0 : index
    %0 = vector.load %arg5[%c0, %c0_0] : memref<192x1xf32, #tpu.memory_space<vmem>>, vector<32x1xf32>
    %c32 = arith.constant 32 : index
    %c0_1 = arith.constant 0 : index
    %1 = vector.load %arg5[%c32, %c0_1] : memref<192x1xf32, #tpu.memory_space<vmem>>, vector<32x1xf32>
    %c64 = arith.constant 64 : index
    %c0_2 = arith.constant 0 : index
    %2 = vector.load %arg5[%c64, %c0_2] : memref<192x1xf32, #tpu.memory_space<vmem>>, vector<32x1xf32>
    %c96 = arith.constant 96 : index
    %c0_3 = arith.constant 0 : index
    %3 = vector.load %arg5[%c96, %c0_3] : memref<192x1xf32, #tpu.memory_space<vmem>>, vector<32x1xf32>
    %c128 = arith.constant 128 : index
    %c0_4 = arith.constant 0 : index
    %4 = vector.load %arg5[%c128, %c0_4] : memref<192x1xf32, #tpu.memory_space<vmem>>, vector<32x1xf32>
    %c160 = arith.constant 160 : index
    %c0_5 = arith.constant 0 : index
    %5 = vector.load %arg5[%c160, %c0_5] : memref<192x1xf32, #tpu.memory_space<vmem>>, vector<32x1xf32>
    %6 = vector.extract_strided_slice %5 {offsets = [0, 0], sizes = [1, 1], strides = [1, 1]} : vector<32x1xf32> to vector<1x1xf32>
    %c0_6 = arith.constant 0 : index
    %c0_7 = arith.constant 0 : index
    %7 = vector.load %arg3[%c0_6, %c0_7] : memref<32x32xf32, #tpu.memory_space<vmem>>, vector<32x32xf32>
    %c0_8 = arith.constant 0 : index
    %c0_9 = arith.constant 0 : index
    %8 = vector.load %arg1[%c0_8, %c0_9] : memref<8x128xf32, #tpu.memory_space<vmem>>, vector<1x128xf32>
    %9 = vector.broadcast %0 : vector<32x1xf32> to vector<32x128xf32>
    %10 = vector.broadcast %8 : vector<1x128xf32> to vector<32x128xf32>
    %11 = arith.mulf %9, %10 : vector<32x128xf32>
    %12 = vector.broadcast %1 : vector<32x1xf32> to vector<32x128xf32>
    %13 = arith.addf %11, %12 : vector<32x128xf32>
    %14 = math.tanh %13 : vector<32x128xf32>
    %c1_i32 = arith.constant 1 : i32
    %15 = arith.index_cast %c1_i32 : i32 to index
    %c0_10 = arith.constant 0 : index
    %16 = vector.load %arg1[%15, %c0_10] : memref<8x128xf32, #tpu.memory_space<vmem>>, vector<1x128xf32>
    %17 = vector.broadcast %0 : vector<32x1xf32> to vector<32x128xf32>
    %18 = vector.broadcast %16 : vector<1x128xf32> to vector<32x128xf32>
    %19 = arith.mulf %17, %18 : vector<32x128xf32>
    %20 = vector.broadcast %1 : vector<32x1xf32> to vector<32x128xf32>
    %21 = arith.addf %19, %20 : vector<32x128xf32>
    %cst = arith.constant dense<0.000000e+00> : vector<32x128xf32>
    %22 = tpu.matmul %7, %14, %cst {dimension_numbers = #tpu.dot_dimension_numbers<[1], [0], [0], [1], [0, 0, 1, 1], [], []>} : vector<32x32xf32>, vector<32x128xf32>, vector<32x128xf32> -> vector<32x128xf32>
    %23 = arith.addf %22, %21 : vector<32x128xf32>
    %24 = math.tanh %23 : vector<32x128xf32>
    %c2_i32 = arith.constant 2 : i32
    %25 = arith.index_cast %c2_i32 : i32 to index
    %c0_11 = arith.constant 0 : index
    %26 = vector.load %arg1[%25, %c0_11] : memref<8x128xf32, #tpu.memory_space<vmem>>, vector<1x128xf32>
    %27 = vector.broadcast %0 : vector<32x1xf32> to vector<32x128xf32>
    %28 = vector.broadcast %26 : vector<1x128xf32> to vector<32x128xf32>
    %29 = arith.mulf %27, %28 : vector<32x128xf32>
    %30 = vector.broadcast %1 : vector<32x1xf32> to vector<32x128xf32>
    %31 = arith.addf %29, %30 : vector<32x128xf32>
    %cst_12 = arith.constant dense<0.000000e+00> : vector<32x128xf32>
    %32 = tpu.matmul %7, %24, %cst_12 {dimension_numbers = #tpu.dot_dimension_numbers<[1], [0], [0], [1], [0, 0, 1, 1], [], []>} : vector<32x32xf32>, vector<32x128xf32>, vector<32x128xf32> -> vector<32x128xf32>
    %33 = arith.addf %32, %31 : vector<32x128xf32>
    %34 = math.tanh %33 : vector<32x128xf32>
    %c3_i32 = arith.constant 3 : i32
    %35 = arith.index_cast %c3_i32 : i32 to index
    %c0_13 = arith.constant 0 : index
    %36 = vector.load %arg1[%35, %c0_13] : memref<8x128xf32, #tpu.memory_space<vmem>>, vector<1x128xf32>
    %37 = vector.broadcast %0 : vector<32x1xf32> to vector<32x128xf32>
    %38 = vector.broadcast %36 : vector<1x128xf32> to vector<32x128xf32>
    %39 = arith.mulf %37, %38 : vector<32x128xf32>
    %40 = vector.broadcast %1 : vector<32x1xf32> to vector<32x128xf32>
    %41 = arith.addf %39, %40 : vector<32x128xf32>
    %cst_14 = arith.constant dense<0.000000e+00> : vector<32x128xf32>
    %42 = tpu.matmul %7, %34, %cst_14 {dimension_numbers = #tpu.dot_dimension_numbers<[1], [0], [0], [1], [0, 0, 1, 1], [], []>} : vector<32x32xf32>, vector<32x128xf32>, vector<32x128xf32> -> vector<32x128xf32>
    %43 = arith.addf %42, %41 : vector<32x128xf32>
    %44 = math.tanh %43 : vector<32x128xf32>
    %c4_i32 = arith.constant 4 : i32
    %45 = arith.index_cast %c4_i32 : i32 to index
    %c0_15 = arith.constant 0 : index
    %46 = vector.load %arg1[%45, %c0_15] : memref<8x128xf32, #tpu.memory_space<vmem>>, vector<1x128xf32>
    %47 = vector.broadcast %0 : vector<32x1xf32> to vector<32x128xf32>
    %48 = vector.broadcast %46 : vector<1x128xf32> to vector<32x128xf32>
    %49 = arith.mulf %47, %48 : vector<32x128xf32>
    %50 = vector.broadcast %1 : vector<32x1xf32> to vector<32x128xf32>
    %51 = arith.addf %49, %50 : vector<32x128xf32>
    %cst_16 = arith.constant dense<0.000000e+00> : vector<32x128xf32>
    %52 = tpu.matmul %7, %44, %cst_16 {dimension_numbers = #tpu.dot_dimension_numbers<[1], [0], [0], [1], [0, 0, 1, 1], [], []>} : vector<32x32xf32>, vector<32x128xf32>, vector<32x128xf32> -> vector<32x128xf32>
    %53 = arith.addf %52, %51 : vector<32x128xf32>
    %54 = math.tanh %53 : vector<32x128xf32>
    %c5_i32 = arith.constant 5 : i32
    %55 = arith.index_cast %c5_i32 : i32 to index
    %c0_17 = arith.constant 0 : index
    %56 = vector.load %arg1[%55, %c0_17] : memref<8x128xf32, #tpu.memory_space<vmem>>, vector<1x128xf32>
    %57 = vector.broadcast %0 : vector<32x1xf32> to vector<32x128xf32>
    %58 = vector.broadcast %56 : vector<1x128xf32> to vector<32x128xf32>
    %59 = arith.mulf %57, %58 : vector<32x128xf32>
    %60 = vector.broadcast %1 : vector<32x1xf32> to vector<32x128xf32>
    %61 = arith.addf %59, %60 : vector<32x128xf32>
    %cst_18 = arith.constant dense<0.000000e+00> : vector<32x128xf32>
    %62 = tpu.matmul %7, %54, %cst_18 {dimension_numbers = #tpu.dot_dimension_numbers<[1], [0], [0], [1], [0, 0, 1, 1], [], []>} : vector<32x32xf32>, vector<32x128xf32>, vector<32x128xf32> -> vector<32x128xf32>
    %63 = arith.addf %62, %61 : vector<32x128xf32>
    %64 = math.tanh %63 : vector<32x128xf32>
    %c6_i32 = arith.constant 6 : i32
    %65 = arith.index_cast %c6_i32 : i32 to index
    %c0_19 = arith.constant 0 : index
    %66 = vector.load %arg1[%65, %c0_19] : memref<8x128xf32, #tpu.memory_space<vmem>>, vector<1x128xf32>
    %67 = vector.broadcast %0 : vector<32x1xf32> to vector<32x128xf32>
    %68 = vector.broadcast %66 : vector<1x128xf32> to vector<32x128xf32>
    %69 = arith.mulf %67, %68 : vector<32x128xf32>
    %70 = vector.broadcast %1 : vector<32x1xf32> to vector<32x128xf32>
    %71 = arith.addf %69, %70 : vector<32x128xf32>
    %cst_20 = arith.constant dense<0.000000e+00> : vector<32x128xf32>
    %72 = tpu.matmul %7, %64, %cst_20 {dimension_numbers = #tpu.dot_dimension_numbers<[1], [0], [0], [1], [0, 0, 1, 1], [], []>} : vector<32x32xf32>, vector<32x128xf32>, vector<32x128xf32> -> vector<32x128xf32>
    %73 = arith.addf %72, %71 : vector<32x128xf32>
    %74 = math.tanh %73 : vector<32x128xf32>
    %c7_i32 = arith.constant 7 : i32
    %75 = arith.index_cast %c7_i32 : i32 to index
    %c0_21 = arith.constant 0 : index
    %76 = vector.load %arg1[%75, %c0_21] : memref<8x128xf32, #tpu.memory_space<vmem>>, vector<1x128xf32>
    %77 = vector.broadcast %0 : vector<32x1xf32> to vector<32x128xf32>
    %78 = vector.broadcast %76 : vector<1x128xf32> to vector<32x128xf32>
    %79 = arith.mulf %77, %78 : vector<32x128xf32>
    %80 = vector.broadcast %1 : vector<32x1xf32> to vector<32x128xf32>
    %81 = arith.addf %79, %80 : vector<32x128xf32>
    %cst_22 = arith.constant dense<0.000000e+00> : vector<32x128xf32>
    %82 = tpu.matmul %7, %74, %cst_22 {dimension_numbers = #tpu.dot_dimension_numbers<[1], [0], [0], [1], [0, 0, 1, 1], [], []>} : vector<32x32xf32>, vector<32x128xf32>, vector<32x128xf32> -> vector<32x128xf32>
    %83 = arith.addf %82, %81 : vector<32x128xf32>
    %84 = math.tanh %83 : vector<32x128xf32>
    %c7_i32_23 = arith.constant 7 : i32
    %c0_24 = arith.constant 0 : index
    %c0_25 = arith.constant 0 : index
    %85 = vector.load %arg4[%c0_24, %c0_25] : memref<32x32xf32, #tpu.memory_space<vmem>>, vector<32x32xf32>
    %cst_26 = arith.constant dense<0.000000e+00> : vector<32x128xf32>
    %86 = tpu.matmul %85, %84, %cst_26 {dimension_numbers = #tpu.dot_dimension_numbers<[1], [0], [0], [1], [0, 0, 1, 1], [], []>} : vector<32x32xf32>, vector<32x128xf32>, vector<32x128xf32> -> vector<32x128xf32>
    %c0_27 = arith.constant 0 : index
    %c0_28 = arith.constant 0 : index
    %87 = vector.load %arg2[%c0_27, %c0_28] : memref<1x128xf32, #tpu.memory_space<vmem>>, vector<1x128xf32>
    %88 = vector.broadcast %2 : vector<32x1xf32> to vector<32x128xf32>
    %89 = vector.broadcast %87 : vector<1x128xf32> to vector<32x128xf32>
    %90 = arith.mulf %88, %89 : vector<32x128xf32>
    %91 = arith.addf %86, %90 : vector<32x128xf32>
    %92 = vector.broadcast %3 : vector<32x1xf32> to vector<32x128xf32>
    %93 = arith.addf %91, %92 : vector<32x128xf32>
    %cst_29 = arith.constant 0.000000e+00 : f32
    %94 = vector.broadcast %cst_29 : f32 to vector<32x128xf32>
    %95 = arith.maximumf %93, %94 : vector<32x128xf32>
    %96 = vector.broadcast %4 : vector<32x1xf32> to vector<32x128xf32>
    %97 = arith.mulf %96, %95 : vector<32x128xf32>
    %cst_30 = arith.constant dense<0.000000e+00> : vector<128xf32>
    %98 = vector.multi_reduction <add>, %97, %cst_30 [0] : vector<32x128xf32> to vector<128xf32>
    %99 = vector.shape_cast %98 : vector<128xf32> to vector<1x128xf32>
    %100 = vector.broadcast %6 : vector<1x1xf32> to vector<1x128xf32>
    %101 = arith.addf %99, %100 : vector<1x128xf32>
    %cst_31 = arith.constant 0.000000e+00 : f32
    %102 = vector.broadcast %cst_31 : f32 to vector<1x128xf32>
    %103 = arith.minimumf %101, %102 : vector<1x128xf32>
    %104 = math.absf %101 : vector<1x128xf32>
    %cst_32 = arith.constant 0.000000e+00 : f32
    %105 = vector.broadcast %cst_32 : f32 to vector<1x128xf32>
    %106 = arith.subf %105, %104 : vector<1x128xf32>
    %107 = math.exp %106 : vector<1x128xf32>
    %108 = math.log1p %107 : vector<1x128xf32>
    %109 = arith.subf %103, %108 : vector<1x128xf32>
    %c0_33 = arith.constant 0 : index
    %c0_34 = arith.constant 0 : index
    %110 = vector.load %arg6[%c0_33, %c0_34] : memref<1x128xf32, #tpu.memory_space<vmem>>, vector<1x128xf32>
    tpu.vector_store %arg6[%c0_33, %c0_34], %109 {strides = array<i32>} : memref<1x128xf32, #tpu.memory_space<vmem>>, vector<1x128xf32>,
    return
  }
  func.func @transform_0(%arg0: i32) -> (i32, i32) {
    %c0_i32 = arith.constant 0 : i32
    %c0_i32_0 = arith.constant 0 : i32
    return %c0_i32, %arg0 : i32, i32
  }
  func.func @transform_1(%arg0: i32) -> (i32, i32) {
    %c0_i32 = arith.constant 0 : i32
    %c0_i32_0 = arith.constant 0 : i32
    return %c0_i32, %arg0 : i32, i32
  }
  func.func @transform_2(%arg0: i32) -> (i32, i32) {
    %c0_i32 = arith.constant 0 : i32
    %c0_i32_0 = arith.constant 0 : i32
    %c0_i32_1 = arith.constant 0 : i32
    return %c0_i32, %c0_i32_0 : i32, i32
  }
  func.func @transform_3(%arg0: i32) -> (i32, i32) {
    %c0_i32 = arith.constant 0 : i32
    %c0_i32_0 = arith.constant 0 : i32
    %c0_i32_1 = arith.constant 0 : i32
    return %c0_i32, %c0_i32_0 : i32, i32
  }
  func.func @transform_4(%arg0: i32) -> (i32, i32) {
    %c0_i32 = arith.constant 0 : i32
    %c0_i32_0 = arith.constant 0 : i32
    %c0_i32_1 = arith.constant 0 : i32
    return %c0_i32, %c0_i32_0 : i32, i32
  }
  func.func @transform_5(%arg0: i32) -> (i32, i32) {
    %c0_i32 = arith.constant 0 : i32
    %c0_i32_0 = arith.constant 0 : i32
    return %c0_i32, %arg0 : i32, i32
  }
}

</mosaic_0001>

<llo_original>
// kernel: _critic_net_forward.1
$region0: #{_critic_net_forward.1}
  #allocation0 [shape = 'u32[]', space=smem, size = 0x4, offset = 0x4, fixed_abs, tag = 'smem constant byte address 0x4 - core index']
  #allocation1 [shape = 'u32[144,128]{1,0:T(1,128)}', space=vmem, size = 0x12000, scoped, tag = 'internal scratch']
  %s0 = inlined_call_operand.vmem [shape: f32[8,128], index: 0, kind: input, shape index: {}]
  %s1 = inlined_call_operand.vmem [shape: f32[1,128], index: 1, kind: input, shape index: {}]
  %s2 = inlined_call_operand.vmem [shape: f32[32,32], index: 2, kind: input, shape index: {}]
  %s3 = inlined_call_operand.vmem [shape: f32[32,32], index: 3, kind: input, shape index: {}]
  %s4 = inlined_call_operand.vmem [shape: f32[192,1], index: 4, kind: input, shape index: {}]
  %s5 = inlined_call_operand.vmem [shape: f32[1,128], index: 5, kind: output, shape index: {}]
  %s6 = sld [smem:[#allocation0]]
  $region30: #{_critic_net_forward.1} parent=0
    _
  %s8 = ssub.s32 1, %s6
  %s9 = scalar_select 0, %s8, %s6
  // Predicated region
  $region2: #{_critic_net_forward.1} parent=0 // pred_check
    _
  $region3: #{_critic_net_forward.1} parent=0 // pred_check_branch
    %11 = sbr.rel (0) target = $region5
  $region4: #{_critic_net_forward.1} parent=0 // pred_region
    _
  $region5: #{_critic_net_forward.1} parent=0 // pred_fallthru
    _
  // Predicated region
  $region6: #{_critic_net_forward.1} parent=0 // pred_check
    _
  $region7: #{_critic_net_forward.1} parent=0 // pred_check_branch
    %13 = sbr.rel (0) target = $region9
  $region8: #{_critic_net_forward.1} parent=0 // pred_region
    _
  $region9: #{_critic_net_forward.1} parent=0 // pred_fallthru
    _
  // Predicated region
  $region10: #{_critic_net_forward.1} parent=0 // pred_check
    _
  $region11: #{_critic_net_forward.1} parent=0 // pred_check_branch
    %15 = sbr.rel (0) target = $region13
  $region12: #{_critic_net_forward.1} parent=0 // pred_region
    _
  $region13: #{_critic_net_forward.1} parent=0 // pred_fallthru
    _
  // Predicated region
  $region14: #{_critic_net_forward.1} parent=0 // pred_check
    _
  $region15: #{_critic_net_forward.1} parent=0 // pred_check_branch
    %17 = sbr.rel (0) target = $region17
  $region16: #{_critic_net_forward.1} parent=0 // pred_region
    _
  $region17: #{_critic_net_forward.1} parent=0 // pred_fallthru
    _
  // Predicated region
  $region18: #{_critic_net_forward.1} parent=0 // pred_check
    _
  $region19: #{_critic_net_forward.1} parent=0 // pred_check_branch
    %19 = sbr.rel (0) target = $region21
  $region20: #{_critic_net_forward.1} parent=0 // pred_region
    _
  $region21: #{_critic_net_forward.1} parent=0 // pred_fallthru
    _
  %v20 = vld [vmem:[%s4] sm:$0xff]
  %v21 = vld [vmem:[%s4 + $0x8] sm:$0xff]
  %v22 = vld [vmem:[%s4 + $0x10] sm:$0xff]
  %v23 = vld [vmem:[%s4 + $0x18] sm:$0xff]
  %v24 = vld [vmem:[%s4 + $0x20] sm:$0xff]
  %v25 = vld [vmem:[%s4 + $0x28] sm:$0xff]
  %v26 = vld [vmem:[%s4 + $0x30] sm:$0xff]
  %v27 = vld [vmem:[%s4 + $0x38] sm:$0xff]
  %v28 = vld [vmem:[%s4 + $0x40] sm:$0xff]
  %v29 = vld [vmem:[%s4 + $0x48] sm:$0xff]
  %v30 = vld [vmem:[%s4 + $0x50] sm:$0xff]
  %v31 = vld [vmem:[%s4 + $0x58] sm:$0xff]
  %v32 = vld [vmem:[%s4 + $0x60] sm:$0xff]
  %v33 = vld [vmem:[%s4 + $0x68] sm:$0xff]
  %v34 = vld [vmem:[%s4 + $0x70] sm:$0xff]
  %v35 = vld [vmem:[%s4 + $0x78] sm:$0xff]
  %v36 = vld [vmem:[%s4 + $0x80] sm:$0xff]
  %v37 = vld [vmem:[%s4 + $0x88] sm:$0xff]
  %v38 = vld [vmem:[%s4 + $0x90] sm:$0xff]
  %v39 = vld [vmem:[%s4 + $0x98] sm:$0xff]
  %v40 = vld [vmem:[%s4 + $0xa0] sm:$0xff]
  %v41 = vld [vmem:[%s2] sm:$0xff]
  %v42 = vld [vmem:[%s2 + $0x8] sm:$0xff]
  %v43 = vld [vmem:[%s2 + $0x10] sm:$0xff]
  %v44 = vld [vmem:[%s2 + $0x18] sm:$0xff]
  %v45 = vld [vmem:[%s0] sm:$0x1]
  %47 = vset.pattern.permute.xlu0 0
  %48 = vperm.xlu0 %47, %v20
  %v49 = vpop.permute.xlu0 %48
  %52 = vset.pattern.permute.xlu0 0
  %53 = vperm.xlu0 %52, %v21
  %v54 = vpop.permute.xlu0 %53
  %57 = vset.pattern.permute.xlu0 0
  %58 = vperm.xlu0 %57, %v22
  %v59 = vpop.permute.xlu0 %58
  %62 = vset.pattern.permute.xlu0 0
  %63 = vperm.xlu0 %62, %v23
  %v64 = vpop.permute.xlu0 %63
  %v66 = vlaneseq
  %v67 = vshrl.u32 %v66, 7
  %v68 = vsub.s32 0, %v67
  %v69 = vrot.slane %v45, %v68
  %v70 = vmul.f32 %v49, %v69
  %v71 = vmul.f32 %v54, %v69
  %v72 = vmul.f32 %v59, %v69
  %v73 = vmul.f32 %v64, %v69
  %75 = vset.pattern.permute.xlu0 0
  %76 = vperm.xlu0 %75, %v24
  %v77 = vpop.permute.xlu0 %76
  %80 = vset.pattern.permute.xlu0 0
  %81 = vperm.xlu0 %80, %v25
  %v82 = vpop.permute.xlu0 %81
  %85 = vset.pattern.permute.xlu0 0
  %86 = vperm.xlu0 %85, %v26
  %v87 = vpop.permute.xlu0 %86
  %90 = vset.pattern.permute.xlu0 0
  %91 = vperm.xlu0 %90, %v27
  %v92 = vpop.permute.xlu0 %91
  %v94 = vadd.f32 %v70, %v77
  %v95 = vadd.f32 %v71, %v82
  %v96 = vadd.f32 %v72, %v87
  %v97 = vadd.f32 %v73, %v92
  %v98 = vtanh.pop %v94
  %v99 = vtanh.pop %v95
  %v100 = vtanh.pop %v96
  %v101 = vtanh.pop %v97
  %v102 = vld [vmem:[%s0 + $0x1] sm:$0x1]
  %v103 = vlaneseq
  %v104 = vshrl.u32 %v103, 7
  %v105 = vsub.s32 0, %v104
  %v106 = vrot.slane %v102, %v105
  %v107 = vmul.f32 %v49, %v106
  %v108 = vmul.f32 %v54, %v106
  %v109 = vmul.f32 %v59, %v106
  %v110 = vmul.f32 %v64, %v106
  %v111 = vadd.f32 %v107, %v77
  %v112 = vadd.f32 %v108, %v82
  %v113 = vadd.f32 %v109, %v87
  %v114 = vadd.f32 %v110, %v92
  %vm115 = vcmask 261120
  %v117 = vsel %vm115, %v41, 0
  %v120 = vsel %vm115, %v42, 0
  %v123 = vsel %vm115, %v43, 0
  %v126 = vsel %vm115, %v44, 0
  %128 = vmatprep.subr.mxu0 0.0
  %129 = vmatpush1.msra.mxu0 %v98
  %130 = vmatprep.subr.mxu0 0.0
  %131 = vmatpush1.msra.mxu0 %v99
  %132 = vmatprep.subr.mxu0 0.0
  %133 = vmatpush1.msra.mxu0 %v100
  %134 = vmatprep.subr.mxu0 0.0
  %135 = vmatpush1.msra.mxu0 %v101
  %136 = vmatprep.subr.mxu0 0.0
  %137 = vmatpush1.msra.mxu0 0.0
  %138 = vmatprep.subr.mxu0 0.0
  %139 = vmatpush1.msra.mxu0 0.0
  %140 = vmatprep.subr.mxu0 0.0
  %141 = vmatpush1.msra.mxu0 0.0
  %142 = vmatprep.subr.mxu0 0.0
  %143 = vmatpush1.msra.mxu0 0.0
  %144 = vmatprep.subr.mxu0 0.0
  %145 = vmatpush1.msra.mxu0 0.0
  %146 = vmatprep.subr.mxu0 0.0
  %147 = vmatpush1.msra.mxu0 0.0
  %148 = vmatprep.subr.mxu0 0.0
  %149 = vmatpush1.msra.mxu0 0.0
  %150 = vmatprep.subr.mxu0 0.0
  %151 = vmatpush1.msra.mxu0 0.0
  %152 = vmatprep.subr.mxu0 0.0
  %153 = vmatpush1.msra.mxu0 0.0
  %154 = vmatprep.subr.mxu0 0.0
  %155 = vmatpush1.msra.mxu0 0.0
  %156 = vmatprep.subr.mxu0 0.0
  %157 = vmatpush1.msra.mxu0 0.0
  %158 = vmatprep.subr.mxu0 0.0
  %159 = vmatpush1.msra.mxu0 0.0
  %160 = vmatprep.subr.mxu0 0.0
  %161 = vmatpush1.msra.mxu0 0.0
  %162 = vmatprep.subr.mxu0 0.0
  %163 = vmatpush1.msra.mxu0 0.0
  %164 = vmatprep.subr.mxu0 0.0
  %165 = vmatpush1.msra.mxu0 0.0
  %166 = vmatprep.subr.mxu0 0.0
  %167 = vmatpush1.msra.mxu0 0.0
  %168 = vmatprep.subr.mxu0 0.0
  %169 = vmatpush1.msra.mxu0 0.0
  %170 = vmatprep.subr.mxu0 0.0
  %171 = vmatpush1.msra.mxu0 0.0
  %172 = vmatprep.subr.mxu0 0.0
  %173 = vmatpush1.msra.mxu0 0.0
  %174 = vmatprep.subr.mxu0 0.0
  %175 = vmatpush1.msra.mxu0 0.0
  %176 = vmatprep.subr.mxu0 0.0
  %177 = vmatpush1.msra.mxu0 0.0
  %178 = vmatprep.subr.mxu0 0.0
  %179 = vmatpush1.msra.mxu0 0.0
  %180 = vmatprep.subr.mxu0 0.0
  %181 = vmatpush1.msra.mxu0 0.0
  %182 = vmatprep.subr.mxu0 0.0
  %183 = vmatpush1.msra.mxu0 0.0
  %184 = vmatprep.subr.mxu0 0.0
  %185 = vmatpush1.msra.mxu0 0.0
  %186 = vmatprep.subr.mxu0 0.0
  %187 = vmatpush1.msra.mxu0 0.0
  %188 = vmatprep.subr.mxu0 0.0
  %189 = vmatpush1.msra.mxu0 0.0
  %190 = vmatprep.subr.mxu0 0.0
  %191 = vmatpush1.msra.mxu0 0.0
  %192 = vmatprep.mubr.f32.mxu0 0.0
  %193 = vmatmul.mubr.f32.gmra.mrb[0].mxu0 %v117
  %v194 = vpop.f32.mrb[0].mxu0
  %v195 = vadd.f32 %v111, %v194
  %v196 = vpop.f32.mrb[0].mxu0
  %197 = vmatprep.mubr.f32.mxu0 0.0
  %198 = vmatmul.mubr.f32.gmra.mrb[0].mxu0 %v120
  %v199 = vpop.f32.mrb[0].mxu0
  %v200 = vadd.f32 %v112, %v199
  %v201 = vpop.f32.mrb[0].mxu0
  %202 = vmatprep.mubr.f32.mxu0 0.0
  %203 = vmatmul.mubr.f32.gmra.mrb[0].mxu0 %v123
  %v204 = vpop.f32.mrb[0].mxu0
  %v205 = vadd.f32 %v113, %v204
  %v206 = vpop.f32.mrb[0].mxu0
  %207 = vmatprep.mubr.f32.mxu0 0.0
  %208 = vmatmul.mubr.f32.gmra.mrb[0].mxu0 %v126
  %v209 = vpop.f32.mrb[0].mxu0
  %v210 = vadd.f32 %v114, %v209
  %v211 = vpop.f32.mrb[0].mxu0
  %212 = vdwg.mxu0
  %v213 = vtanh.pop %v195
  %v214 = vtanh.pop %v200
  %v215 = vtanh.pop %v205
  %v216 = vtanh.pop %v210
  %v217 = vld [vmem:[%s0 + $0x2] sm:$0x1]
  %v218 = vlaneseq
  %v219 = vshrl.u32 %v218, 7
  %v220 = vsub.s32 0, %v219
  %v221 = vrot.slane %v217, %v220
  %v222 = vmul.f32 %v49, %v221
  %v223 = vmul.f32 %v54, %v221
  %v224 = vmul.f32 %v59, %v221
  %v225 = vmul.f32 %v64, %v221
  %v226 = vadd.f32 %v222, %v77
  %v227 = vadd.f32 %v223, %v82
  %v228 = vadd.f32 %v224, %v87
  %v229 = vadd.f32 %v225, %v92
  %230 = vmatprep.subr.mxu0 0.0
  %231 = vmatpush1.msra.mxu0 %v213
  %232 = vmatprep.subr.mxu0 0.0
  %233 = vmatpush1.msra.mxu0 %v214
  %234 = vmatprep.subr.mxu0 0.0
  %235 = vmatpush1.msra.mxu0 %v215
  %236 = vmatprep.subr.mxu0 0.0
  %237 = vmatpush1.msra.mxu0 %v216
  %238 = vmatprep.subr.mxu0 0.0
  %239 = vmatpush1.msra.mxu0 0.0
  %240 = vmatprep.subr.mxu0 0.0
  %241 = vmatpush1.msra.mxu0 0.0
  %242 = vmatprep.subr.mxu0 0.0
  %243 = vmatpush1.msra.mxu0 0.0
  %244 = vmatprep.subr.mxu0 0.0
  %245 = vmatpush1.msra.mxu0 0.0
  %246 = vmatprep.subr.mxu0 0.0
  %247 = vmatpush1.msra.mxu0 0.0
  %248 = vmatprep.subr.mxu0 0.0
  %249 = vmatpush1.msra.mxu0 0.0
  %250 = vmatprep.subr.mxu0 0.0
  %251 = vmatpush1.msra.mxu0 0.0
  %252 = vmatprep.subr.mxu0 0.0
  %253 = vmatpush1.msra.mxu0 0.0
  %254 = vmatprep.subr.mxu0 0.0
  %255 = vmatpush1.msra.mxu0 0.0
  %256 = vmatprep.subr.mxu0 0.0
  %257 = vmatpush1.msra.mxu0 0.0
  %258 = vmatprep.subr.mxu0 0.0
  %259 = vmatpush1.msra.mxu0 0.0
  %260 = vmatprep.subr.mxu0 0.0
  %261 = vmatpush1.msra.mxu0 0.0
  %262 = vmatprep.subr.mxu0 0.0
  %263 = vmatpush1.msra.mxu0 0.0
  %264 = vmatprep.subr.mxu0 0.0
  %265 = vmatpush1.msra.mxu0 0.0
  %266 = vmatprep.subr.mxu0 0.0
  %267 = vmatpush1.msra.mxu0 0.0
  %268 = vmatprep.subr.mxu0 0.0
  %269 = vmatpush1.msra.mxu0 0.0
  %270 = vmatprep.subr.mxu0 0.0
  %271 = vmatpush1.msra.mxu0 0.0
  %272 = vmatprep.subr.mxu0 0.0
  %273 = vmatpush1.msra.mxu0 0.0
  %274 = vmatprep.subr.mxu0 0.0
  %275 = vmatpush1.msra.mxu0 0.0
  %276 = vmatprep.subr.mxu0 0.0
  %277 = vmatpush1.msra.mxu0 0.0
  %278 = vmatprep.subr.mxu0 0.0
  %279 = vmatpush1.msra.mxu0 0.0
  %280 = vmatprep.subr.mxu0 0.0
  %281 = vmatpush1.msra.mxu0 0.0
  %282 = vmatprep.subr.mxu0 0.0
  %283 = vmatpush1.msra.mxu0 0.0
  %284 = vmatprep.subr.mxu0 0.0
  %285 = vmatpush1.msra.mxu0 0.0
  %286 = vmatprep.subr.mxu0 0.0
  %287 = vmatpush1.msra.mxu0 0.0
  %288 = vmatprep.subr.mxu0 0.0
  %289 = vmatpush1.msra.mxu0 0.0
  %290 = vmatprep.subr.mxu0 0.0
  %291 = vmatpush1.msra.mxu0 0.0
  %292 = vmatprep.subr.mxu0 0.0
  %293 = vmatpush1.msra.mxu0 0.0
  %294 = vmatprep.mubr.f32.mxu0 0.0
  %295 = vmatmul.mubr.f32.gmra.mrb[0].mxu0 %v117
  %v296 = vpop.f32.mrb[0].mxu0
  %v297 = vadd.f32 %v226, %v296
  %v298 = vpop.f32.mrb[0].mxu0
  %299 = vmatprep.mubr.f32.mxu0 0.0
  %300 = vmatmul.mubr.f32.gmra.mrb[0].mxu0 %v120
  %v301 = vpop.f32.mrb[0].mxu0
  %v302 = vadd.f32 %v227, %v301
  %v303 = vpop.f32.mrb[0].mxu0
  %304 = vmatprep.mubr.f32.mxu0 0.0
  %305 = vmatmul.mubr.f32.gmra.mrb[0].mxu0 %v123
  %v306 = vpop.f32.mrb[0].mxu0
  %v307 = vadd.f32 %v228, %v306
  %v308 = vpop.f32.mrb[0].mxu0
  %309 = vmatprep.mubr.f32.mxu0 0.0
  %310 = vmatmul.mubr.f32.gmra.mrb[0].mxu0 %v126
  %v311 = vpop.f32.mrb[0].mxu0
  %v312 = vadd.f32 %v229, %v311
  %v313 = vpop.f32.mrb[0].mxu0
  %314 = vdwg.mxu0
  %v315 = vtanh.pop %v297
  %v316 = vtanh.pop %v302
  %v317 = vtanh.pop %v307
  %v318 = vtanh.pop %v312
  %v319 = vld [vmem:[%s0 + $0x3] sm:$0x1]
  %v320 = vlaneseq
  %v321 = vshrl.u32 %v320, 7
  %v322 = vsub.s32 0, %v321
  %v323 = vrot.slane %v319, %v322
  %v324 = vmul.f32 %v49, %v323
  %v325 = vmul.f32 %v54, %v323
  %v326 = vmul.f32 %v59, %v323
  %v327 = vmul.f32 %v64, %v323
  %v328 = vadd.f32 %v324, %v77
  %v329 = vadd.f32 %v325, %v82
  %v330 = vadd.f32 %v326, %v87
  %v331 = vadd.f32 %v327, %v92
  %332 = vmatprep.subr.mxu0 0.0
  %333 = vmatpush1.msra.mxu0 %v315
  %334 = vmatprep.subr.mxu0 0.0
  %335 = vmatpush1.msra.mxu0 %v316
  %336 = vmatprep.subr.mxu0 0.0
  %337 = vmatpush1.msra.mxu0 %v317
  %338 = vmatprep.subr.mxu0 0.0
  %339 = vmatpush1.msra.mxu0 %v318
  %340 = vmatprep.subr.mxu0 0.0
  %341 = vmatpush1.msra.mxu0 0.0
  %342 = vmatprep.subr.mxu0 0.0
  %343 = vmatpush1.msra.mxu0 0.0
  %344 = vmatprep.subr.mxu0 0.0
  %345 = vmatpush1.msra.mxu0 0.0
  %346 = vmatprep.subr.mxu0 0.0
  %347 = vmatpush1.msra.mxu0 0.0
  %348 = vmatprep.subr.mxu0 0.0
  %349 = vmatpush1.msra.mxu0 0.0
  %350 = vmatprep.subr.mxu0 0.0
  %351 = vmatpush1.msra.mxu0 0.0
  %352 = vmatprep.subr.mxu0 0.0
  %353 = vmatpush1.msra.mxu0 0.0
  %354 = vmatprep.subr.mxu0 0.0
  %355 = vmatpush1.msra.mxu0 0.0
  %356 = vmatprep.subr.mxu0 0.0
  %357 = vmatpush1.msra.mxu0 0.0
  %358 = vmatprep.subr.mxu0 0.0
  %359 = vmatpush1.msra.mxu0 0.0
  %360 = vmatprep.subr.mxu0 0.0
  %361 = vmatpush1.msra.mxu0 0.0
  %362 = vmatprep.subr.mxu0 0.0
  %363 = vmatpush1.msra.mxu0 0.0
  %364 = vmatprep.subr.mxu0 0.0
  %365 = vmatpush1.msra.mxu0 0.0
  %366 = vmatprep.subr.mxu0 0.0
  %367 = vmatpush1.msra.mxu0 0.0
  %368 = vmatprep.subr.mxu0 0.0
  %369 = vmatpush1.msra.mxu0 0.0
  %370 = vmatprep.subr.mxu0 0.0
  %371 = vmatpush1.msra.mxu0 0.0
  %372 = vmatprep.subr.mxu0 0.0
  %373 = vmatpush1.msra.mxu0 0.0
  %374 = vmatprep.subr.mxu0 0.0
  %375 = vmatpush1.msra.mxu0 0.0
  %376 = vmatprep.subr.mxu0 0.0
  %377 = vmatpush1.msra.mxu0 0.0
  %378 = vmatprep.subr.mxu0 0.0
  %379 = vmatpush1.msra.mxu0 0.0
  %380 = vmatprep.subr.mxu0 0.0
  %381 = vmatpush1.msra.mxu0 0.0
  %382 = vmatprep.subr.mxu0 0.0
  %383 = vmatpush1.msra.mxu0 0.0
  %384 = vmatprep.subr.mxu0 0.0
  %385 = vmatpush1.msra.mxu0 0.0
  %386 = vmatprep.subr.mxu0 0.0
  %387 = vmatpush1.msra.mxu0 0.0
  %388 = vmatprep.subr.mxu0 0.0
  %389 = vmatpush1.msra.mxu0 0.0
  %390 = vmatprep.subr.mxu0 0.0
  %391 = vmatpush1.msra.mxu0 0.0
  %392 = vmatprep.subr.mxu0 0.0
  %393 = vmatpush1.msra.mxu0 0.0
  %394 = vmatprep.subr.mxu0 0.0
  %395 = vmatpush1.msra.mxu0 0.0
  %396 = vmatprep.mubr.f32.mxu0 0.0
  %397 = vmatmul.mubr.f32.gmra.mrb[0].mxu0 %v117
  %v398 = vpop.f32.mrb[0].mxu0
  %v399 = vadd.f32 %v328, %v398
  %v400 = vpop.f32.mrb[0].mxu0
  %401 = vmatprep.mubr.f32.mxu0 0.0
  %402 = vmatmul.mubr.f32.gmra.mrb[0].mxu0 %v120
  %v403 = vpop.f32.mrb[0].mxu0
  %v404 = vadd.f32 %v329, %v403
  %v405 = vpop.f32.mrb[0].mxu0
  %406 = vmatprep.mubr.f32.mxu0 0.0
  %407 = vmatmul.mubr.f32.gmra.mrb[0].mxu0 %v123
  %v408 = vpop.f32.mrb[0].mxu0
  %v409 = vadd.f32 %v330, %v408
  %v410 = vpop.f32.mrb[0].mxu0
  %411 = vmatprep.mubr.f32.mxu0 0.0
  %412 = vmatmul.mubr.f32.gmra.mrb[0].mxu0 %v126
  %v413 = vpop.f32.mrb[0].mxu0
  %v414 = vadd.f32 %v331, %v413
  %v415 = vpop.f32.mrb[0].mxu0
  %416 = vdwg.mxu0
  %v417 = vtanh.pop %v399
  %v418 = vtanh.pop %v404
  %v419 = vtanh.pop %v409
  %v420 = vtanh.pop %v414
  %v421 = vld [vmem:[%s0 + $0x4] sm:$0x1]
  %v422 = vlaneseq
  %v423 = vshrl.u32 %v422, 7
  %v424 = vsub.s32 0, %v423
  %v425 = vrot.slane %v421, %v424
  %v426 = vmul.f32 %v49, %v425
  %v427 = vmul.f32 %v54, %v425
  %v428 = vmul.f32 %v59, %v425
  %v429 = vmul.f32 %v64, %v425
  %v430 = vadd.f32 %v426, %v77
  %v431 = vadd.f32 %v427, %v82
  %v432 = vadd.f32 %v428, %v87
  %v433 = vadd.f32 %v429, %v92
  %434 = vmatprep.subr.mxu0 0.0
  %435 = vmatpush1.msra.mxu0 %v417
  %436 = vmatprep.subr.mxu0 0.0
  %437 = vmatpush1.msra.mxu0 %v418
  %438 = vmatprep.subr.mxu0 0.0
  %439 = vmatpush1.msra.mxu0 %v419
  %440 = vmatprep.subr.mxu0 0.0
  %441 = vmatpush1.msra.mxu0 %v420
  %442 = vmatprep.subr.mxu0 0.0
  %443 = vmatpush1.msra.mxu0 0.0
  %444 = vmatprep.subr.mxu0 0.0
  %445 = vmatpush1.msra.mxu0 0.0
  %446 = vmatprep.subr.mxu0 0.0
  %447 = vmatpush1.msra.mxu0 0.0
  %448 = vmatprep.subr.mxu0 0.0
  %449 = vmatpush1.msra.mxu0 0.0
  %450 = vmatprep.subr.mxu0 0.0
  %451 = vmatpush1.msra.mxu0 0.0
  %452 = vmatprep.subr.mxu0 0.0
  %453 = vmatpush1.msra.mxu0 0.0
  %454 = vmatprep.subr.mxu0 0.0
  %455 = vmatpush1.msra.mxu0 0.0
  %456 = vmatprep.subr.mxu0 0.0
  %457 = vmatpush1.msra.mxu0 0.0
  %458 = vmatprep.subr.mxu0 0.0
  %459 = vmatpush1.msra.mxu0 0.0
  %460 = vmatprep.subr.mxu0 0.0
  %461 = vmatpush1.msra.mxu0 0.0
  %462 = vmatprep.subr.mxu0 0.0
  %463 = vmatpush1.msra.mxu0 0.0
  %464 = vmatprep.subr.mxu0 0.0
  %465 = vmatpush1.msra.mxu0 0.0
  %466 = vmatprep.subr.mxu0 0.0
  %467 = vmatpush1.msra.mxu0 0.0
  %468 = vmatprep.subr.mxu0 0.0
  %469 = vmatpush1.msra.mxu0 0.0
  %470 = vmatprep.subr.mxu0 0.0
  %471 = vmatpush1.msra.mxu0 0.0
  %472 = vmatprep.subr.mxu0 0.0
  %473 = vmatpush1.msra.mxu0 0.0
  %474 = vmatprep.subr.mxu0 0.0
  %475 = vmatpush1.msra.mxu0 0.0
  %476 = vmatprep.subr.mxu0 0.0
  %477 = vmatpush1.msra.mxu0 0.0
  %478 = vmatprep.subr.mxu0 0.0
  %479 = vmatpush1.msra.mxu0 0.0
  %480 = vmatprep.subr.mxu0 0.0
  %481 = vmatpush1.msra.mxu0 0.0
  %482 = vmatprep.subr.mxu0 0.0
  %483 = vmatpush1.msra.mxu0 0.0
  %484 = vmatprep.subr.mxu0 0.0
  %485 = vmatpush1.msra.mxu0 0.0
  %486 = vmatprep.subr.mxu0 0.0
  %487 = vmatpush1.msra.mxu0 0.0
  %488 = vmatprep.subr.mxu0 0.0
  %489 = vmatpush1.msra.mxu0 0.0
  %490 = vmatprep.subr.mxu0 0.0
  %491 = vmatpush1.msra.mxu0 0.0
  %492 = vmatprep.subr.mxu0 0.0
  %493 = vmatpush1.msra.mxu0 0.0
  %494 = vmatprep.subr.mxu0 0.0
  %495 = vmatpush1.msra.mxu0 0.0
  %496 = vmatprep.subr.mxu0 0.0
  %497 = vmatpush1.msra.mxu0 0.0
  %498 = vmatprep.mubr.f32.mxu0 0.0
  %499 = vmatmul.mubr.f32.gmra.mrb[0].mxu0 %v117
  %v500 = vpop.f32.mrb[0].mxu0
  %v501 = vadd.f32 %v430, %v500
  %v502 = vpop.f32.mrb[0].mxu0
  %503 = vmatprep.mubr.f32.mxu0 0.0
  %504 = vmatmul.mubr.f32.gmra.mrb[0].mxu0 %v120
  %v505 = vpop.f32.mrb[0].mxu0
  %v506 = vadd.f32 %v431, %v505
  %v507 = vpop.f32.mrb[0].mxu0
  %508 = vmatprep.mubr.f32.mxu0 0.0
  %509 = vmatmul.mubr.f32.gmra.mrb[0].mxu0 %v123
  %v510 = vpop.f32.mrb[0].mxu0
  %v511 = vadd.f32 %v432, %v510
  %v512 = vpop.f32.mrb[0].mxu0
  %513 = vmatprep.mubr.f32.mxu0 0.0
  %514 = vmatmul.mubr.f32.gmra.mrb[0].mxu0 %v126
  %v515 = vpop.f32.mrb[0].mxu0
  %v516 = vadd.f32 %v433, %v515
  %v517 = vpop.f32.mrb[0].mxu0
  %518 = vdwg.mxu0
  %v519 = vtanh.pop %v501
  %v520 = vtanh.pop %v506
  %v521 = vtanh.pop %v511
  %v522 = vtanh.pop %v516
  %v523 = vld [vmem:[%s0 + $0x5] sm:$0x1]
  %v524 = vlaneseq
  %v525 = vshrl.u32 %v524, 7
  %v526 = vsub.s32 0, %v525
  %v527 = vrot.slane %v523, %v526
  %v528 = vmul.f32 %v49, %v527
  %v529 = vmul.f32 %v54, %v527
  %v530 = vmul.f32 %v59, %v527
  %v531 = vmul.f32 %v64, %v527
  %v532 = vadd.f32 %v528, %v77
  %v533 = vadd.f32 %v529, %v82
  %v534 = vadd.f32 %v530, %v87
  %v535 = vadd.f32 %v531, %v92
  %536 = vmatprep.subr.mxu0 0.0
  %537 = vmatpush1.msra.mxu0 %v519
  %538 = vmatprep.subr.mxu0 0.0
  %539 = vmatpush1.msra.mxu0 %v520
  %540 = vmatprep.subr.mxu0 0.0
  %541 = vmatpush1.msra.mxu0 %v521
  %542 = vmatprep.subr.mxu0 0.0
  %543 = vmatpush1.msra.mxu0 %v522
  %544 = vmatprep.subr.mxu0 0.0
  %545 = vmatpush1.msra.mxu0 0.0
  %546 = vmatprep.subr.mxu0 0.0
  %547 = vmatpush1.msra.mxu0 0.0
  %548 = vmatprep.subr.mxu0 0.0
  %549 = vmatpush1.msra.mxu0 0.0
  %550 = vmatprep.subr.mxu0 0.0
  %551 = vmatpush1.msra.mxu0 0.0
  %552 = vmatprep.subr.mxu0 0.0
  %553 = vmatpush1.msra.mxu0 0.0
  %554 = vmatprep.subr.mxu0 0.0
  %555 = vmatpush1.msra.mxu0 0.0
  %556 = vmatprep.subr.mxu0 0.0
  %557 = vmatpush1.msra.mxu0 0.0
  %558 = vmatprep.subr.mxu0 0.0
  %559 = vmatpush1.msra.mxu0 0.0
  %560 = vmatprep.subr.mxu0 0.0
  %561 = vmatpush1.msra.mxu0 0.0
  %562 = vmatprep.subr.mxu0 0.0
  %563 = vmatpush1.msra.mxu0 0.0
  %564 = vmatprep.subr.mxu0 0.0
  %565 = vmatpush1.msra.mxu0 0.0
  %566 = vmatprep.subr.mxu0 0.0
  %567 = vmatpush1.msra.mxu0 0.0
  %568 = vmatprep.subr.mxu0 0.0
  %569 = vmatpush1.msra.mxu0 0.0
  %570 = vmatprep.subr.mxu0 0.0
  %571 = vmatpush1.msra.mxu0 0.0
  %572 = vmatprep.subr.mxu0 0.0
  %573 = vmatpush1.msra.mxu0 0.0
  %574 = vmatprep.subr.mxu0 0.0
  %575 = vmatpush1.msra.mxu0 0.0
  %576 = vmatprep.subr.mxu0 0.0
  %577 = vmatpush1.msra.mxu0 0.0
  %578 = vmatprep.subr.mxu0 0.0
  %579 = vmatpush1.msra.mxu0 0.0
  %580 = vmatprep.subr.mxu0 0.0
  %581 = vmatpush1.msra.mxu0 0.0
  %582 = vmatprep.subr.mxu0 0.0
  %583 = vmatpush1.msra.mxu0 0.0
  %584 = vmatprep.subr.mxu0 0.0
  %585 = vmatpush1.msra.mxu0 0.0
  %586 = vmatprep.subr.mxu0 0.0
  %587 = vmatpush1.msra.mxu0 0.0
  %588 = vmatprep.subr.mxu0 0.0
  %589 = vmatpush1.msra.mxu0 0.0
  %590 = vmatprep.subr.mxu0 0.0
  %591 = vmatpush1.msra.mxu0 0.0
  %592 = vmatprep.subr.mxu0 0.0
  %593 = vmatpush1.msra.mxu0 0.0
  %594 = vmatprep.subr.mxu0 0.0
  %595 = vmatpush1.msra.mxu0 0.0
  %596 = vmatprep.subr.mxu0 0.0
  %597 = vmatpush1.msra.mxu0 0.0
  %598 = vmatprep.subr.mxu0 0.0
  %599 = vmatpush1.msra.mxu0 0.0
  %600 = vmatprep.mubr.f32.mxu0 0.0
  %601 = vmatmul.mubr.f32.gmra.mrb[0].mxu0 %v117
  %v602 = vpop.f32.mrb[0].mxu0
  %v603 = vadd.f32 %v532, %v602
  %v604 = vpop.f32.mrb[0].mxu0
  %605 = vmatprep.mubr.f32.mxu0 0.0
  %606 = vmatmul.mubr.f32.gmra.mrb[0].mxu0 %v120
  %v607 = vpop.f32.mrb[0].mxu0
  %v608 = vadd.f32 %v533, %v607
  %v609 = vpop.f32.mrb[0].mxu0
  %610 = vmatprep.mubr.f32.mxu0 0.0
  %611 = vmatmul.mubr.f32.gmra.mrb[0].mxu0 %v123
  %v612 = vpop.f32.mrb[0].mxu0
  %v613 = vadd.f32 %v534, %v612
  %v614 = vpop.f32.mrb[0].mxu0
  %615 = vmatprep.mubr.f32.mxu0 0.0
  %616 = vmatmul.mubr.f32.gmra.mrb[0].mxu0 %v126
  %v617 = vpop.f32.mrb[0].mxu0
  %v618 = vadd.f32 %v535, %v617
  %v619 = vpop.f32.mrb[0].mxu0
  %620 = vdwg.mxu0
  %v621 = vtanh.pop %v603
  %v622 = vtanh.pop %v608
  %v623 = vtanh.pop %v613
  %v624 = vtanh.pop %v618
  %v625 = vld [vmem:[%s0 + $0x6] sm:$0x1]
  %v626 = vlaneseq
  %v627 = vshrl.u32 %v626, 7
  %v628 = vsub.s32 0, %v627
  %v629 = vrot.slane %v625, %v628
  %v630 = vmul.f32 %v49, %v629
  %v631 = vmul.f32 %v54, %v629
  %v632 = vmul.f32 %v59, %v629
  %v633 = vmul.f32 %v64, %v629
  %v634 = vadd.f32 %v630, %v77
  %v635 = vadd.f32 %v631, %v82
  %v636 = vadd.f32 %v632, %v87
  %v637 = vadd.f32 %v633, %v92
  %638 = vmatprep.subr.mxu0 0.0
  %639 = vmatpush1.msra.mxu0 %v621
  %640 = vmatprep.subr.mxu0 0.0
  %641 = vmatpush1.msra.mxu0 %v622
  %642 = vmatprep.subr.mxu0 0.0
  %643 = vmatpush1.msra.mxu0 %v623
  %644 = vmatprep.subr.mxu0 0.0
  %645 = vmatpush1.msra.mxu0 %v624
  %646 = vmatprep.subr.mxu0 0.0
  %647 = vmatpush1.msra.mxu0 0.0
  %648 = vmatprep.subr.mxu0 0.0
  %649 = vmatpush1.msra.mxu0 0.0
  %650 = vmatprep.subr.mxu0 0.0
  %651 = vmatpush1.msra.mxu0 0.0
  %652 = vmatprep.subr.mxu0 0.0
  %653 = vmatpush1.msra.mxu0 0.0
  %654 = vmatprep.subr.mxu0 0.0
  %655 = vmatpush1.msra.mxu0 0.0
  %656 = vmatprep.subr.mxu0 0.0
  %657 = vmatpush1.msra.mxu0 0.0
  %658 = vmatprep.subr.mxu0 0.0
  %659 = vmatpush1.msra.mxu0 0.0
  %660 = vmatprep.subr.mxu0 0.0
  %661 = vmatpush1.msra.mxu0 0.0
  %662 = vmatprep.subr.mxu0 0.0
  %663 = vmatpush1.msra.mxu0 0.0
  %664 = vmatprep.subr.mxu0 0.0
  %665 = vmatpush1.msra.mxu0 0.0
  %666 = vmatprep.subr.mxu0 0.0
  %667 = vmatpush1.msra.mxu0 0.0
  %668 = vmatprep.subr.mxu0 0.0
  %669 = vmatpush1.msra.mxu0 0.0
  %670 = vmatprep.subr.mxu0 0.0
  %671 = vmatpush1.msra.mxu0 0.0
  %672 = vmatprep.subr.mxu0 0.0
  %673 = vmatpush1.msra.mxu0 0.0
  %674 = vmatprep.subr.mxu0 0.0
  %675 = vmatpush1.msra.mxu0 0.0
  %676 = vmatprep.subr.mxu0 0.0
  %677 = vmatpush1.msra.mxu0 0.0
  %678 = vmatprep.subr.mxu0 0.0
  %679 = vmatpush1.msra.mxu0 0.0
  %680 = vmatprep.subr.mxu0 0.0
  %681 = vmatpush1.msra.mxu0 0.0
  %682 = vmatprep.subr.mxu0 0.0
  %683 = vmatpush1.msra.mxu0 0.0
  %684 = vmatprep.subr.mxu0 0.0
  %685 = vmatpush1.msra.mxu0 0.0
  %686 = vmatprep.subr.mxu0 0.0
  %687 = vmatpush1.msra.mxu0 0.0
  %688 = vmatprep.subr.mxu0 0.0
  %689 = vmatpush1.msra.mxu0 0.0
  %690 = vmatprep.subr.mxu0 0.0
  %691 = vmatpush1.msra.mxu0 0.0
  %692 = vmatprep.subr.mxu0 0.0
  %693 = vmatpush1.msra.mxu0 0.0
  %694 = vmatprep.subr.mxu0 0.0
  %695 = vmatpush1.msra.mxu0 0.0
  %696 = vmatprep.subr.mxu0 0.0
  %697 = vmatpush1.msra.mxu0 0.0
  %698 = vmatprep.subr.mxu0 0.0
  %699 = vmatpush1.msra.mxu0 0.0
  %700 = vmatprep.subr.mxu0 0.0
  %701 = vmatpush1.msra.mxu0 0.0
  %702 = vmatprep.mubr.f32.mxu0 0.0
  %703 = vmatmul.mubr.f32.gmra.mrb[0].mxu0 %v117
  %v704 = vpop.f32.mrb[0].mxu0
  %v705 = vadd.f32 %v634, %v704
  %v706 = vpop.f32.mrb[0].mxu0
  %707 = vmatprep.mubr.f32.mxu0 0.0
  %708 = vmatmul.mubr.f32.gmra.mrb[0].mxu0 %v120
  %v709 = vpop.f32.mrb[0].mxu0
  %v710 = vadd.f32 %v635, %v709
  %v711 = vpop.f32.mrb[0].mxu0
  %712 = vmatprep.mubr.f32.mxu0 0.0
  %713 = vmatmul.mubr.f32.gmra.mrb[0].mxu0 %v123
  %v714 = vpop.f32.mrb[0].mxu0
  %v715 = vadd.f32 %v636, %v714
  %v716 = vpop.f32.mrb[0].mxu0
  %717 = vmatprep.mubr.f32.mxu0 0.0
  %718 = vmatmul.mubr.f32.gmra.mrb[0].mxu0 %v126
  %v719 = vpop.f32.mrb[0].mxu0
  %v720 = vadd.f32 %v637, %v719
  %v721 = vpop.f32.mrb[0].mxu0
  %722 = vdwg.mxu0
  %v723 = vtanh.pop %v705
  %v724 = vtanh.pop %v710
  %v725 = vtanh.pop %v715
  %v726 = vtanh.pop %v720
  %v727 = vld [vmem:[%s0 + $0x7] sm:$0x1]
  %v728 = vlaneseq
  %v729 = vshrl.u32 %v728, 7
  %v730 = vsub.s32 0, %v729
  %v731 = vrot.slane %v727, %v730
  %v732 = vmul.f32 %v49, %v731
  %v733 = vmul.f32 %v54, %v731
  %v734 = vmul.f32 %v59, %v731
  %v735 = vmul.f32 %v64, %v731
  %v736 = vadd.f32 %v732, %v77
  %v737 = vadd.f32 %v733, %v82
  %v738 = vadd.f32 %v734, %v87
  %v739 = vadd.f32 %v735, %v92
  %740 = vmatprep.subr.mxu0 0.0
  %741 = vmatpush1.msra.mxu0 %v723
  %742 = vmatprep.subr.mxu0 0.0
  %743 = vmatpush1.msra.mxu0 %v724
  %744 = vmatprep.subr.mxu0 0.0
  %745 = vmatpush1.msra.mxu0 %v725
  %746 = vmatprep.subr.mxu0 0.0
  %747 = vmatpush1.msra.mxu0 %v726
  %748 = vmatprep.subr.mxu0 0.0
  %749 = vmatpush1.msra.mxu0 0.0
  %750 = vmatprep.subr.mxu0 0.0
  %751 = vmatpush1.msra.mxu0 0.0
  %752 = vmatprep.subr.mxu0 0.0
  %753 = vmatpush1.msra.mxu0 0.0
  %754 = vmatprep.subr.mxu0 0.0
  %755 = vmatpush1.msra.mxu0 0.0
  %756 = vmatprep.subr.mxu0 0.0
  %757 = vmatpush1.msra.mxu0 0.0
  %758 = vmatprep.subr.mxu0 0.0
  %759 = vmatpush1.msra.mxu0 0.0
  %760 = vmatprep.subr.mxu0 0.0
  %761 = vmatpush1.msra.mxu0 0.0
  %762 = vmatprep.subr.mxu0 0.0
  %763 = vmatpush1.msra.mxu0 0.0
  %764 = vmatprep.subr.mxu0 0.0
  %765 = vmatpush1.msra.mxu0 0.0
  %766 = vmatprep.subr.mxu0 0.0
  %767 = vmatpush1.msra.mxu0 0.0
  %768 = vmatprep.subr.mxu0 0.0
  %769 = vmatpush1.msra.mxu0 0.0
  %770 = vmatprep.subr.mxu0 0.0
  %771 = vmatpush1.msra.mxu0 0.0
  %772 = vmatprep.subr.mxu0 0.0
  %773 = vmatpush1.msra.mxu0 0.0
  %774 = vmatprep.subr.mxu0 0.0
  %775 = vmatpush1.msra.mxu0 0.0
  %776 = vmatprep.subr.mxu0 0.0
  %777 = vmatpush1.msra.mxu0 0.0
  %778 = vmatprep.subr.mxu0 0.0
  %779 = vmatpush1.msra.mxu0 0.0
  %780 = vmatprep.subr.mxu0 0.0
  %781 = vmatpush1.msra.mxu0 0.0
  %782 = vmatprep.subr.mxu0 0.0
  %783 = vmatpush1.msra.mxu0 0.0
  %784 = vmatprep.subr.mxu0 0.0
  %785 = vmatpush1.msra.mxu0 0.0
  %786 = vmatprep.subr.mxu0 0.0
  %787 = vmatpush1.msra.mxu0 0.0
  %788 = vmatprep.subr.mxu0 0.0
  %789 = vmatpush1.msra.mxu0 0.0
  %790 = vmatprep.subr.mxu0 0.0
  %791 = vmatpush1.msra.mxu0 0.0
  %792 = vmatprep.subr.mxu0 0.0
  %793 = vmatpush1.msra.mxu0 0.0
  %794 = vmatprep.subr.mxu0 0.0
  %795 = vmatpush1.msra.mxu0 0.0
  %796 = vmatprep.subr.mxu0 0.0
  %797 = vmatpush1.msra.mxu0 0.0
  %798 = vmatprep.subr.mxu0 0.0
  %799 = vmatpush1.msra.mxu0 0.0
  %800 = vmatprep.subr.mxu0 0.0
  %801 = vmatpush1.msra.mxu0 0.0
  %802 = vmatprep.subr.mxu0 0.0
  %803 = vmatpush1.msra.mxu0 0.0
  %804 = vmatprep.mubr.f32.mxu0 0.0
  %805 = vmatmul.mubr.f32.gmra.mrb[0].mxu0 %v117
  %v806 = vpop.f32.mrb[0].mxu0
  %v807 = vadd.f32 %v736, %v806
  %v808 = vpop.f32.mrb[0].mxu0
  %809 = vmatprep.mubr.f32.mxu0 0.0
  %810 = vmatmul.mubr.f32.gmra.mrb[0].mxu0 %v120
  %v811 = vpop.f32.mrb[0].mxu0
  %v812 = vadd.f32 %v737, %v811
  %v813 = vpop.f32.mrb[0].mxu0
  %814 = vmatprep.mubr.f32.mxu0 0.0
  %815 = vmatmul.mubr.f32.gmra.mrb[0].mxu0 %v123
  %v816 = vpop.f32.mrb[0].mxu0
  %v817 = vadd.f32 %v738, %v816
  %v818 = vpop.f32.mrb[0].mxu0
  %819 = vmatprep.mubr.f32.mxu0 0.0
  %820 = vmatmul.mubr.f32.gmra.mrb[0].mxu0 %v126
  %v821 = vpop.f32.mrb[0].mxu0
  %v822 = vadd.f32 %v739, %v821
  %v823 = vpop.f32.mrb[0].mxu0
  %824 = vdwg.mxu0
  %v825 = vtanh.pop %v807
  %v826 = vtanh.pop %v812
  %v827 = vtanh.pop %v817
  %v828 = vtanh.pop %v822
  %v829 = vld [vmem:[%s3] sm:$0xff]
  %v830 = vld [vmem:[%s3 + $0x8] sm:$0xff]
  %v831 = vld [vmem:[%s3 + $0x10] sm:$0xff]
  %v832 = vld [vmem:[%s3 + $0x18] sm:$0xff]
  %v833 = vld [vmem:[%s1] sm:$0x1]
  %835 = vset.pattern.permute.xlu0 0
  %836 = vperm.xlu0 %835, %v28
  %v837 = vpop.permute.xlu0 %836
  %840 = vset.pattern.permute.xlu0 0
  %841 = vperm.xlu0 %840, %v29
  %v842 = vpop.permute.xlu0 %841
  %845 = vset.pattern.permute.xlu0 0
  %846 = vperm.xlu0 %845, %v30
  %v847 = vpop.permute.xlu0 %846
  %850 = vset.pattern.permute.xlu0 0
  %851 = vperm.xlu0 %850, %v31
  %v852 = vpop.permute.xlu0 %851
  %v855 = vlaneseq
  %v856 = vshrl.u32 %v855, 7
  %v857 = vsub.s32 0, %v856
  %v858 = vrot.slane %v833, %v857
  %v860 = vmul.f32 %v837, %v858
  %v861 = vmul.f32 %v842, %v858
  %v862 = vmul.f32 %v847, %v858
  %v863 = vmul.f32 %v852, %v858
  %v865 = vsel %vm115, %v829, 0
  %v868 = vsel %vm115, %v830, 0
  %v871 = vsel %vm115, %v831, 0
  %v874 = vsel %vm115, %v832, 0
  %876 = vmatprep.subr.mxu0 0.0
  %877 = vmatpush1.msra.mxu0 %v825
  %878 = vmatprep.subr.mxu0 0.0
  %879 = vmatpush1.msra.mxu0 %v826
  %880 = vmatprep.subr.mxu0 0.0
  %881 = vmatpush1.msra.mxu0 %v827
  %882 = vmatprep.subr.mxu0 0.0
  %883 = vmatpush1.msra.mxu0 %v828
  %884 = vmatprep.subr.mxu0 0.0
  %885 = vmatpush1.msra.mxu0 0.0
  %886 = vmatprep.subr.mxu0 0.0
  %887 = vmatpush1.msra.mxu0 0.0
  %888 = vmatprep.subr.mxu0 0.0
  %889 = vmatpush1.msra.mxu0 0.0
  %890 = vmatprep.subr.mxu0 0.0
  %891 = vmatpush1.msra.mxu0 0.0
  %892 = vmatprep.subr.mxu0 0.0
  %893 = vmatpush1.msra.mxu0 0.0
  %894 = vmatprep.subr.mxu0 0.0
  %895 = vmatpush1.msra.mxu0 0.0
  %896 = vmatprep.subr.mxu0 0.0
  %897 = vmatpush1.msra.mxu0 0.0
  %898 = vmatprep.subr.mxu0 0.0
  %899 = vmatpush1.msra.mxu0 0.0
  %900 = vmatprep.subr.mxu0 0.0
  %901 = vmatpush1.msra.mxu0 0.0
  %902 = vmatprep.subr.mxu0 0.0
  %903 = vmatpush1.msra.mxu0 0.0
  %904 = vmatprep.subr.mxu0 0.0
  %905 = vmatpush1.msra.mxu0 0.0
  %906 = vmatprep.subr.mxu0 0.0
  %907 = vmatpush1.msra.mxu0 0.0
  %908 = vmatprep.subr.mxu0 0.0
  %909 = vmatpush1.msra.mxu0 0.0
  %910 = vmatprep.subr.mxu0 0.0
  %911 = vmatpush1.msra.mxu0 0.0
  %912 = vmatprep.subr.mxu0 0.0
  %913 = vmatpush1.msra.mxu0 0.0
  %914 = vmatprep.subr.mxu0 0.0
  %915 = vmatpush1.msra.mxu0 0.0
  %916 = vmatprep.subr.mxu0 0.0
  %917 = vmatpush1.msra.mxu0 0.0
  %918 = vmatprep.subr.mxu0 0.0
  %919 = vmatpush1.msra.mxu0 0.0
  %920 = vmatprep.subr.mxu0 0.0
  %921 = vmatpush1.msra.mxu0 0.0
  %922 = vmatprep.subr.mxu0 0.0
  %923 = vmatpush1.msra.mxu0 0.0
  %924 = vmatprep.subr.mxu0 0.0
  %925 = vmatpush1.msra.mxu0 0.0
  %926 = vmatprep.subr.mxu0 0.0
  %927 = vmatpush1.msra.mxu0 0.0
  %928 = vmatprep.subr.mxu0 0.0
  %929 = vmatpush1.msra.mxu0 0.0
  %930 = vmatprep.subr.mxu0 0.0
  %931 = vmatpush1.msra.mxu0 0.0
  %932 = vmatprep.subr.mxu0 0.0
  %933 = vmatpush1.msra.mxu0 0.0
  %934 = vmatprep.subr.mxu0 0.0
  %935 = vmatpush1.msra.mxu0 0.0
  %936 = vmatprep.subr.mxu0 0.0
  %937 = vmatpush1.msra.mxu0 0.0
  %938 = vmatprep.subr.mxu0 0.0
  %939 = vmatpush1.msra.mxu0 0.0
  %940 = vmatprep.mubr.f32.mxu0 0.0
  %941 = vmatmul.mubr.f32.gmra.mrb[0].mxu0 %v865
  %v942 = vpop.f32.mrb[0].mxu0
  %v943 = vadd.f32 %v860, %v942
  %v944 = vpop.f32.mrb[0].mxu0
  %945 = vmatprep.mubr.f32.mxu0 0.0
  %946 = vmatmul.mubr.f32.gmra.mrb[0].mxu0 %v868
  %v947 = vpop.f32.mrb[0].mxu0
  %v948 = vadd.f32 %v861, %v947
  %v949 = vpop.f32.mrb[0].mxu0
  %950 = vmatprep.mubr.f32.mxu0 0.0
  %951 = vmatmul.mubr.f32.gmra.mrb[0].mxu0 %v871
  %v952 = vpop.f32.mrb[0].mxu0
  %v953 = vadd.f32 %v862, %v952
  %v954 = vpop.f32.mrb[0].mxu0
  %955 = vmatprep.mubr.f32.mxu0 0.0
  %956 = vmatmul.mubr.f32.gmra.mrb[0].mxu0 %v874
  %v957 = vpop.f32.mrb[0].mxu0
  %v958 = vadd.f32 %v863, %v957
  %v959 = vpop.f32.mrb[0].mxu0
  %960 = vdwg.mxu0
  %962 = vset.pattern.permute.xlu0 0
  %963 = vperm.xlu0 %962, %v32
  %v964 = vpop.permute.xlu0 %963
  %967 = vset.pattern.permute.xlu0 0
  %968 = vperm.xlu0 %967, %v33
  %v969 = vpop.permute.xlu0 %968
  %972 = vset.pattern.permute.xlu0 0
  %973 = vperm.xlu0 %972, %v34
  %v974 = vpop.permute.xlu0 %973
  %977 = vset.pattern.permute.xlu0 0
  %978 = vperm.xlu0 %977, %v35
  %v979 = vpop.permute.xlu0 %978
  %v981 = vadd.f32 %v943, %v964
  %v982 = vadd.f32 %v948, %v969
  %v983 = vadd.f32 %v953, %v974
  %v984 = vadd.f32 %v958, %v979
  %v985 = vmax.f32 %v981, 0.0
  %v986 = vmax.f32 %v982, 0.0
  %v987 = vmax.f32 %v983, 0.0
  %v988 = vmax.f32 %v984, 0.0
  %990 = vset.pattern.permute.xlu0 0
  %991 = vperm.xlu0 %990, %v36
  %v992 = vpop.permute.xlu0 %991
  %995 = vset.pattern.permute.xlu0 0
  %996 = vperm.xlu0 %995, %v37
  %v997 = vpop.permute.xlu0 %996
  %1000 = vset.pattern.permute.xlu0 0
  %1001 = vperm.xlu0 %1000, %v38
  %v1002 = vpop.permute.xlu0 %1001
  %1005 = vset.pattern.permute.xlu0 0
  %1006 = vperm.xlu0 %1005, %v39
  %v1007 = vpop.permute.xlu0 %1006
  %v1009 = vmul.f32 %v992, %v985
  %v1010 = vmul.f32 %v997, %v986
  %v1011 = vmul.f32 %v1002, %v987
  %v1012 = vmul.f32 %v1007, %v988
  %v1013 = vadd.f32 %v1009, %v1010
  %v1014 = vadd.f32 %v1013, %v1011
  %v1015 = vadd.f32 %v1014, %v1012
  %v1016 = vrot.slane %v1015, 4
  %v1017 = vadd.f32 %v1015, %v1016
  %v1018 = vrot.slane %v1017, 2
  %v1019 = vadd.f32 %v1017, %v1018
  %v1020 = vrot.slane %v1019, 1
  %v1021 = vadd.f32 %v1019, %v1020
  %1023 = vset.pattern.permute.xlu0 0
  %1024 = vperm.xlu0 %1023, %v40
  %v1025 = vpop.permute.xlu0 %1024
  %v1027 = vadd.f32 %v1021, %v1025
  %v1028 = vmin.f32 %v1027, 0.0
  %v1029 = vand.u32 2147483647, %v1027
  %v1030 = vsub.f32 0.0, %v1029
  %v1031 = vmul.f32 %v1030, 1.442695
  %v1032 = vpow.pop %v1031
  %v1033 = vadd.f32 %v1032, 1.0
  %v1034 = vlog2.pop %v1033
  %v1035 = vmul.f32 %v1034, 0.6931472
  %v1036 = vmul.f32 -0.5, %v1032
  %v1037 = vadd.f32 %v1036, 1.0
  %v1038 = vmul.f32 %v1037, %v1032
  %v1039 = vand.u32 2147483647, %v1032
  %vm1040 = vcmp.lt.f32.partialorder %v1039, 0.0004427343
  %v1041 = vsel %vm1040, %v1038, %v1035
  %v1042 = vsub.f32 %v1028, %v1041
  %1043 = vst [vmem:[%s5] sm:$0x1] %v1042
  // Predicated region
  $region22: #{_critic_net_forward.1} parent=0 // pred_check
    _
  $region23: #{_critic_net_forward.1} parent=0 // pred_check_branch
    %1045 = sbr.rel (0) target = $region25
  $region24: #{_critic_net_forward.1} parent=0 // pred_region
    _
  $region25: #{_critic_net_forward.1} parent=0 // pred_fallthru
    _
  // Predicated region
  $region26: #{_critic_net_forward.1} parent=0 // pred_check
    _
  $region27: #{_critic_net_forward.1} parent=0 // pred_check_branch
    %1047 = sbr.rel (0) target = $region29
  $region28: #{_critic_net_forward.1} parent=0 // pred_region
    _
  $region29: #{_critic_net_forward.1} parent=0 // pred_fallthru
    _

</llo_original>
